<compile_context>
chip_gen: v5e
topology: v5e:2x2
jax: 0.10.0
libtpu: 0.0.40
codegen_flags: <defaults>
</compile_context>

<pallas_src>
import jax
import jax.numpy as jnp
from jax.experimental import pallas as pl
from jax.experimental.pallas import tpu as pltpu

INPUT_DIM = 3
HIDDEN_DIM = 16


def siamese_kernel(seqs_ref, w1_ref, b1_ref, w2_ref, b2_ref, out_ref):
    # seqs_ref: (2, D, S, B) f32 in VMEM -- both sequences, batch on lanes.
    seqs = seqs_ref[...]
    _, D, S, B = seqs.shape
    inv_s = jnp.float32(1.0 / S)

    # Mean over the sequence axis: sublane reduce * constant (no divide).
    means = jnp.sum(seqs, axis=2) * inv_s           # (2, D, B)
    dist_t = jnp.abs(means[0] - means[1])           # (D, B), batch on lanes

    # fc1 on the VPU: D == 3 is tiny and static, so unroll the contraction as
    # broadcast multiply-adds.  w1 is PyTorch fc1.weight layout (H, D).
    w1 = w1_ref[...]                                # (H, D)
    h = w1[:, 0:1] * dist_t[0:1, :]                 # (H,1)*(1,B) -> (H, B)
    for d in range(1, D):                           # static unroll (D == 3)
        h = h + w1[:, d:d + 1] * dist_t[d:d + 1, :]
    h = jnp.maximum(h + b1_ref[...], 0.0)           # + b1 (H,1), ReLU -> (H, B)

    # fc2 on the VPU: elementwise multiply by w2 column + sublane reduce.
    logit = jnp.sum(h * w2_ref[...], axis=0, keepdims=True) + b2_ref[0]  # (1, B)

    # Lane-dense (1, B) store (full-width, unmasked).
    out_ref[...] = jax.nn.sigmoid(logit).astype(out_ref.dtype)


def siamese_forward(seq1, seq2, w1, b1, w2, b2):
    """seq1, seq2: (B, S, D); w1: (H, D); b1: (H,); w2: (1, H); b2: (1,)."""
    B, S, D = seq1.shape
    H = w1.shape[0]

    # One stacked operand -> one input DMA; batch moved onto the lane axis.
    seqs = jnp.stack([seq1, seq2], axis=0).astype(jnp.float32)   # (2, B, S, D)
    seqs = seqs.transpose(0, 3, 2, 1)                            # (2, D, S, B)

    w1_k = w1.astype(jnp.float32)                                # (H, D)
    b1_k = b1.reshape(H, 1).astype(jnp.float32)                  # (H, 1)
    w2_k = w2.reshape(H, 1).astype(jnp.float32)                  # (H, 1)
    b2_k = b2.reshape(1).astype(jnp.float32)                     # (1,) scalar in SMEM

    vmem = pl.BlockSpec(memory_space=pltpu.MemorySpace.VMEM)
    smem = pl.BlockSpec(memory_space=pltpu.MemorySpace.SMEM)

    out_row = pl.pallas_call(
        siamese_kernel,
        out_shape=jax.ShapeDtypeStruct((1, B), jnp.float32),  # lane-dense
        in_specs=[vmem, vmem, vmem, vmem, smem],
        out_specs=vmem,
    )(seqs, w1_k, b1_k, w2_k, b2_k)

    return out_row.reshape(B, 1)  # back to PyTorch's (B, 1)


def init_params(key, input_dim=INPUT_DIM, hidden_dim=HIDDEN_DIM):
    # Mimics nn.Linear's uniform(-1/sqrt(fan_in), +1/sqrt(fan_in)) init,
    # with weights in native PyTorch layouts.
    k1, k2, k3, k4 = jax.random.split(key, 4)
    bound1 = 1.0 / jnp.sqrt(jnp.float32(input_dim))
    bound2 = 1.0 / jnp.sqrt(jnp.float32(hidden_dim))
    w1 = jax.random.uniform(k1, (hidden_dim, input_dim), jnp.float32, -bound1, bound1)
    b1 = jax.random.uniform(k2, (hidden_dim,), jnp.float32, -bound1, bound1)
    w2 = jax.random.uniform(k3, (1, hidden_dim), jnp.float32, -bound2, bound2)
    b2 = jax.random.uniform(k4, (1,), jnp.float32, -bound2, bound2)
    return w1, b1, w2, b2


def reference_forward(seq1, seq2, w1, b1, w2, b2):
    s1 = seq1.mean(axis=1)
    s2 = seq2.mean(axis=1)
    dist = jnp.abs(s1 - s2)
    x = jnp.maximum(dist @ w1.T + b1, 0.0)
    return jax.nn.sigmoid(x @ w2.T + b2)


if __name__ == "__main__":
    key = jax.random.PRNGKey(0)
    kp, ka, kb = jax.random.split(key, 3)

    batch, seq_len = 2, 8
    w1, b1, w2, b2 = init_params(kp)

    seq1 = jax.random.normal(ka, (batch, seq_len, INPUT_DIM), jnp.float32)
    seq2 = jax.random.normal(kb, (batch, seq_len, INPUT_DIM), jnp.float32)

    out = siamese_forward(seq1, seq2, w1, b1, w2, b2)
    out = jax.block_until_ready(out)

    ref = reference_forward(seq1, seq2, w1, b1, w2, b2)
    assert out.shape == (batch, 1)
    assert jnp.allclose(out, ref, atol=1e-5, rtol=1e-5), (out, ref)

    print("KERNEL_OK")
</pallas_src>

<mosaic_0001>
module attributes {stable_mosaic.version = 11 : i64} {
  func.func @siamese_kernel(%arg0: memref<2x3x8x2xf32, #tpu.memory_space<vmem>>, %arg1: memref<16x3xf32, #tpu.memory_space<vmem>>, %arg2: memref<16x1xf32, #tpu.memory_space<vmem>>, %arg3: memref<16x1xf32, #tpu.memory_space<vmem>>, %arg4: memref<1xf32, #tpu.memory_space<smem>>, %arg5: memref<1x2xf32, #tpu.memory_space<vmem>>) attributes {dimension_semantics = [], scalar_prefetch = 0 : i64, scratch_operands = 0 : i64, tpu.core_type = #tpu.core_type<tc>} {
    %c0 = arith.constant 0 : index
    %c0_0 = arith.constant 0 : index
    %c0_1 = arith.constant 0 : index
    %c0_2 = arith.constant 0 : index
    %0 = vector.load %arg0[%c0, %c0_0, %c0_1, %c0_2] : memref<2x3x8x2xf32, #tpu.memory_space<vmem>>, vector<2x3x8x2xf32>
    %cst = arith.constant dense<0.000000e+00> : vector<2x3x2xf32>
    %1 = vector.multi_reduction <add>, %0, %cst [2] : vector<2x3x8x2xf32> to vector<2x3x2xf32>
    %cst_3 = arith.constant 1.250000e-01 : f32
    %2 = vector.broadcast %cst_3 : f32 to vector<2x3x2xf32>
    %3 = arith.mulf %1, %2 : vector<2x3x2xf32>
    %4 = vector.extract_strided_slice %3 {offsets = [0, 0, 0], sizes = [1, 3, 2], strides = [1, 1, 1]} : vector<2x3x2xf32> to vector<1x3x2xf32>
    %5 = vector.shape_cast %4 : vector<1x3x2xf32> to vector<3x2xf32>
    %6 = vector.extract_strided_slice %3 {offsets = [1, 0, 0], sizes = [1, 3, 2], strides = [1, 1, 1]} : vector<2x3x2xf32> to vector<1x3x2xf32>
    %7 = vector.shape_cast %6 : vector<1x3x2xf32> to vector<3x2xf32>
    %8 = arith.subf %5, %7 : vector<3x2xf32>
    %9 = math.absf %8 : vector<3x2xf32>
    %c0_4 = arith.constant 0 : index
    %c0_5 = arith.constant 0 : index
    %10 = vector.load %arg1[%c0_4, %c0_5] : memref<16x3xf32, #tpu.memory_space<vmem>>, vector<16x3xf32>
    %11 = vector.extract_strided_slice %10 {offsets = [0, 0], sizes = [16, 1], strides = [1, 1]} : vector<16x3xf32> to vector<16x1xf32>
    %12 = vector.extract_strided_slice %9 {offsets = [0, 0], sizes = [1, 2], strides = [1, 1]} : vector<3x2xf32> to vector<1x2xf32>
    %13 = vector.broadcast %11 : vector<16x1xf32> to vector<16x2xf32>
    %14 = vector.broadcast %12 : vector<1x2xf32> to vector<16x2xf32>
    %15 = arith.mulf %13, %14 : vector<16x2xf32>
    %16 = vector.extract_strided_slice %10 {offsets = [0, 1], sizes = [16, 1], strides = [1, 1]} : vector<16x3xf32> to vector<16x1xf32>
    %17 = vector.extract_strided_slice %9 {offsets = [1, 0], sizes = [1, 2], strides = [1, 1]} : vector<3x2xf32> to vector<1x2xf32>
    %18 = vector.broadcast %16 : vector<16x1xf32> to vector<16x2xf32>
    %19 = vector.broadcast %17 : vector<1x2xf32> to vector<16x2xf32>
    %20 = arith.mulf %18, %19 : vector<16x2xf32>
    %21 = arith.addf %15, %20 : vector<16x2xf32>
    %22 = vector.extract_strided_slice %10 {offsets = [0, 2], sizes = [16, 1], strides = [1, 1]} : vector<16x3xf32> to vector<16x1xf32>
    %23 = vector.extract_strided_slice %9 {offsets = [2, 0], sizes = [1, 2], strides = [1, 1]} : vector<3x2xf32> to vector<1x2xf32>
    %24 = vector.broadcast %22 : vector<16x1xf32> to vector<16x2xf32>
    %25 = vector.broadcast %23 : vector<1x2xf32> to vector<16x2xf32>
    %26 = arith.mulf %24, %25 : vector<16x2xf32>
    %27 = arith.addf %21, %26 : vector<16x2xf32>
    %c0_6 = arith.constant 0 : index
    %c0_7 = arith.constant 0 : index
    %28 = vector.load %arg2[%c0_6, %c0_7] : memref<16x1xf32, #tpu.memory_space<vmem>>, vector<16x1xf32>
    %29 = vector.broadcast %28 : vector<16x1xf32> to vector<16x2xf32>
    %30 = arith.addf %27, %29 : vector<16x2xf32>
    %cst_8 = arith.constant 0.000000e+00 : f32
    %31 = vector.broadcast %cst_8 : f32 to vector<16x2xf32>
    %32 = arith.maximumf %30, %31 : vector<16x2xf32>
    %c0_9 = arith.constant 0 : index
    %c0_10 = arith.constant 0 : index
    %33 = vector.load %arg3[%c0_9, %c0_10] : memref<16x1xf32, #tpu.memory_space<vmem>>, vector<16x1xf32>
    %34 = vector.broadcast %33 : vector<16x1xf32> to vector<16x2xf32>
    %35 = arith.mulf %32, %34 : vector<16x2xf32>
    %cst_11 = arith.constant dense<0.000000e+00> : vector<2xf32>
    %36 = vector.multi_reduction <add>, %35, %cst_11 [0] : vector<16x2xf32> to vector<2xf32>
    %37 = vector.shape_cast %36 : vector<2xf32> to vector<1x2xf32>
    %c0_12 = arith.constant 0 : index
    %38 = memref.load %arg4[%c0_12] : memref<1xf32, #tpu.memory_space<smem>>
    %39 = vector.broadcast %38 : f32 to vector<1x2xf32>
    %40 = arith.addf %37, %39 : vector<1x2xf32>
    %41 = arith.negf %40 : vector<1x2xf32>
    %42 = math.exp %41 : vector<1x2xf32>
    %cst_13 = arith.constant 1.000000e+00 : f32
    %43 = vector.broadcast %cst_13 : f32 to vector<1x2xf32>
    %44 = arith.addf %43, %42 : vector<1x2xf32>
    %45 = arith.divf %43, %44 : vector<1x2xf32>
    %c0_14 = arith.constant 0 : index
    %c0_15 = arith.constant 0 : index
    %46 = vector.load %arg5[%c0_14, %c0_15] : memref<1x2xf32, #tpu.memory_space<vmem>>, vector<1x2xf32>
    tpu.vector_store %arg5[%c0_14, %c0_15], %45 {strides = array<i32>} : memref<1x2xf32, #tpu.memory_space<vmem>>, vector<1x2xf32>,
    return
  }
}

</mosaic_0001>

<llo_original>
// kernel: tpu_custom_call.1
$region0: #{tpu_custom_call.1}
  #allocation0 [shape = 'u32[]', space=smem, size = 0x4, offset = 0x4, fixed_abs, tag = 'smem constant byte address 0x4 - core index']
  #allocation1 [shape = 'u32[72,128]{1,0:T(1,128)}', space=vmem, size = 0x9000, scoped, tag = 'internal scratch']
  #allocation2 [shape = 'f32[1]{0:T(128)S(6)}', space=smem, size = 0x200, scoped, tag = 'scoped memory for tpu_custom_call.1']
  %s0 = inlined_call_operand.vmem [shape: f32[2,3,8,2], index: 0, kind: input, shape index: {}]
  %s1 = inlined_call_operand.vmem [shape: f32[16,3], index: 1, kind: input, shape index: {}]
  %s2 = inlined_call_operand.vmem [shape: f32[16,1], index: 2, kind: input, shape index: {}]
  %s3 = inlined_call_operand.vmem [shape: f32[16,1], index: 3, kind: input, shape index: {}]
  %s4 = inlined_call_operand.<no memory space> [shape: f32[1], index: 4, kind: input, shape index: {}]
  %s5 = inlined_call_operand.hbm [shape: f32[1,2], index: 5, kind: output, shape index: {}]
  %s6 = sld [smem:[#allocation0]]
  $region30: #{tpu_custom_call.1} parent=0
    _
  %s8 = ssub.s32 1, %s6
  %s9 = scalar_select 0, %s8, %s6
  %10 = sst [smem:[#allocation2]] %s4
  $region1: #{tpu_custom_call.1} parent=0
    #allocation3 [shape = 'u8[512]{0}', space=vmem, size = 0x400, scoped, tag = 'output window, operand 0, single buffered']
    #allocation4 [shape = 's32[1]{0}', space=sflag, size = 0x4, scoped, tag = 'scoped memory for tpu_custom_call.1']
    %11 = vsyncpa [#allocation4], 0
    // Predicated region
    $region2: #{tpu_custom_call.1} parent=1 // pred_check
      _
    $region3: #{tpu_custom_call.1} parent=1 // pred_check_branch
      %13 = sbr.rel (0) target = $region5
    $region4: #{tpu_custom_call.1} parent=1 // pred_region
      _
    $region5: #{tpu_custom_call.1} parent=1 // pred_fallthru
      _
    // Predicated region
    $region6: #{tpu_custom_call.1} parent=1 // pred_check
      _
    $region7: #{tpu_custom_call.1} parent=1 // pred_check_branch
      %15 = sbr.rel (0) target = $region9
    $region8: #{tpu_custom_call.1} parent=1 // pred_region
      _
    $region9: #{tpu_custom_call.1} parent=1 // pred_fallthru
      _
    // Predicated region
    $region10: #{tpu_custom_call.1} parent=1 // pred_check
      _
    $region11: #{tpu_custom_call.1} parent=1 // pred_check_branch
      %17 = sbr.rel (0) target = $region13
    $region12: #{tpu_custom_call.1} parent=1 // pred_region
      _
    $region13: #{tpu_custom_call.1} parent=1 // pred_fallthru
      _
    // Predicated region
    $region14: #{tpu_custom_call.1} parent=1 // pred_check
      _
    $region15: #{tpu_custom_call.1} parent=1 // pred_check_branch
      %19 = sbr.rel (0) target = $region17
    $region16: #{tpu_custom_call.1} parent=1 // pred_region
      _
    $region17: #{tpu_custom_call.1} parent=1 // pred_fallthru
      _
    // Predicated region
    $region18: #{tpu_custom_call.1} parent=1 // pred_check
      _
    $region19: #{tpu_custom_call.1} parent=1 // pred_check_branch
      %21 = sbr.rel (0) target = $region21
    $region20: #{tpu_custom_call.1} parent=1 // pred_region
      _
    $region21: #{tpu_custom_call.1} parent=1 // pred_fallthru
      _
    %v22 = vld [vmem:[%s0] sm:$0xff]
    %v23 = vld [vmem:[%s0 + $0x8] sm:$0xff]
    %v24 = vld [vmem:[%s0 + $0x10] sm:$0xff]
    %v25 = vld [vmem:[%s0 + $0x18] sm:$0xff]
    %v26 = vld [vmem:[%s0 + $0x20] sm:$0xff]
    %v27 = vld [vmem:[%s0 + $0x28] sm:$0xff]
    %vm28 = vcmask 15360
    %v29 = vsel %vm28, %v22, 0.0
    %v30 = vrot.slane %v29, 4
    %v31 = vadd.f32 %v29, %v30
    %v32 = vrot.slane %v31, 2
    %v33 = vadd.f32 %v31, %v32
    %v34 = vrot.slane %v33, 1
    %v35 = vadd.f32 %v33, %v34
    %v36 = vsel %vm28, %v23, 0.0
    %v37 = vrot.slane %v36, 4
    %v38 = vadd.f32 %v36, %v37
    %v39 = vrot.slane %v38, 2
    %v40 = vadd.f32 %v38, %v39
    %v41 = vrot.slane %v40, 1
    %v42 = vadd.f32 %v40, %v41
    %v43 = vsel %vm28, %v24, 0.0
    %v44 = vrot.slane %v43, 4
    %v45 = vadd.f32 %v43, %v44
    %v46 = vrot.slane %v45, 2
    %v47 = vadd.f32 %v45, %v46
    %v48 = vrot.slane %v47, 1
    %v49 = vadd.f32 %v47, %v48
    %v50 = vsel %vm28, %v25, 0.0
    %v51 = vrot.slane %v50, 4
    %v52 = vadd.f32 %v50, %v51
    %v53 = vrot.slane %v52, 2
    %v54 = vadd.f32 %v52, %v53
    %v55 = vrot.slane %v54, 1
    %v56 = vadd.f32 %v54, %v55
    %v57 = vsel %vm28, %v26, 0.0
    %v58 = vrot.slane %v57, 4
    %v59 = vadd.f32 %v57, %v58
    %v60 = vrot.slane %v59, 2
    %v61 = vadd.f32 %v59, %v60
    %v62 = vrot.slane %v61, 1
    %v63 = vadd.f32 %v61, %v62
    %v64 = vsel %vm28, %v27, 0.0
    %v65 = vrot.slane %v64, 4
    %v66 = vadd.f32 %v64, %v65
    %v67 = vrot.slane %v66, 2
    %v68 = vadd.f32 %v66, %v67
    %v69 = vrot.slane %v68, 1
    %v70 = vadd.f32 %v68, %v69
    %v71 = vmul.f32 %v35, 0.125
    %v72 = vmul.f32 %v42, 0.125
    %v73 = vmul.f32 %v49, 0.125
    %v74 = vmul.f32 %v56, 0.125
    %v75 = vmul.f32 %v63, 0.125
    %v76 = vmul.f32 %v70, 0.125
    %v77 = vsub.f32 %v71, %v74
    %v78 = vsub.f32 %v72, %v75
    %v79 = vsub.f32 %v73, %v76
    %v80 = vand.u32 2147483647, %v77
    %v81 = vand.u32 2147483647, %v78
    %v82 = vand.u32 2147483647, %v79
    %v83 = vld [vmem:[%s1] sm:$0xff]
    %v84 = vld [vmem:[%s1 + $0x8] sm:$0xff]
    %86 = vset.pattern.permute.xlu0 0
    %87 = vperm.xlu0 %86, %v83
    %v88 = vpop.permute.xlu0 %87
    %91 = vset.pattern.permute.xlu0 0
    %92 = vperm.xlu0 %91, %v84
    %v93 = vpop.permute.xlu0 %92
    %v95 = vmul.f32 %v88, %v80
    %v96 = vmul.f32 %v93, %v80
    %97 = vset.pattern.permute.xlu0 1
    %98 = vperm.xlu0 %97, %v83
    %v99 = vpop.permute.xlu0 %98
    %101 = vset.pattern.permute.xlu0 1
    %102 = vperm.xlu0 %101, %v84
    %v103 = vpop.permute.xlu0 %102
    %v105 = vmul.f32 %v99, %v81
    %v106 = vmul.f32 %v103, %v81
    %v107 = vadd.f32 %v95, %v105
    %v108 = vadd.f32 %v96, %v106
    %109 = vset.pattern.permute.xlu0 2
    %110 = vperm.xlu0 %109, %v83
    %v111 = vpop.permute.xlu0 %110
    %113 = vset.pattern.permute.xlu0 2
    %114 = vperm.xlu0 %113, %v84
    %v115 = vpop.permute.xlu0 %114
    %v117 = vmul.f32 %v111, %v82
    %v118 = vmul.f32 %v115, %v82
    %v119 = vadd.f32 %v107, %v117
    %v120 = vadd.f32 %v108, %v118
    %v121 = vld [vmem:[%s2] sm:$0xff]
    %v122 = vld [vmem:[%s2 + $0x8] sm:$0xff]
    %124 = vset.pattern.permute.xlu0 0
    %125 = vperm.xlu0 %124, %v121
    %v126 = vpop.permute.xlu0 %125
    %129 = vset.pattern.permute.xlu0 0
    %130 = vperm.xlu0 %129, %v122
    %v131 = vpop.permute.xlu0 %130
    %v133 = vadd.f32 %v119, %v126
    %v134 = vadd.f32 %v120, %v131
    %v135 = vmax.f32 %v133, 0.0
    %v136 = vmax.f32 %v134, 0.0
    %v137 = vld [vmem:[%s3] sm:$0xff]
    %v138 = vld [vmem:[%s3 + $0x8] sm:$0xff]
    %140 = vset.pattern.permute.xlu0 0
    %141 = vperm.xlu0 %140, %v137
    %v142 = vpop.permute.xlu0 %141
    %145 = vset.pattern.permute.xlu0 0
    %146 = vperm.xlu0 %145, %v138
    %v147 = vpop.permute.xlu0 %146
    %v149 = vmul.f32 %v135, %v142
    %v150 = vmul.f32 %v136, %v147
    %v151 = vsel %vm28, %v149, 0.0
    %v152 = vsel %vm28, %v150, 0.0
    %v153 = vadd.f32 %v151, %v152
    %v154 = vrot.slane %v153, 4
    %v155 = vadd.f32 %v153, %v154
    %v156 = vrot.slane %v155, 2
    %v157 = vadd.f32 %v155, %v156
    %v158 = vrot.slane %v157, 1
    %v159 = vadd.f32 %v157, %v158
    %s160 = sld [smem:[#allocation2]]
    %v161 = vstv %s160
    %v162 = vadd.f32 %v159, %v161
    %v163 = vxor.u32 %v162, 2147483648
    %v164 = vmul.f32 %v163, 1.442695
    %v165 = vpow.pop %v164
    %v166 = vadd.f32 %v165, 1.0
    %v167 = vrcp.pop %v166
    %v168 = vmul.f32 %v166, %v167
    %v169 = vsub.f32 1.0, %v168
    %v170 = vmul.f32 %v167, %v169
    %v171 = vadd.f32 %v167, %v170
    %vm172 = vweird.f32 %v166
    %vm173 = vweird.f32 %v167
    %vm174 = vmor %vm172, %vm173
    %v175 = vsel %vm174, %v167, %v171
    %v176 = vand.u32 2147483647, %v166
    %vm177 = vcmp.eq.f32.partialorder %v176, 8.507059e+37
    %v178 = vand.u32 %v166, 2147483648
    %v179 = vor.u32 1.1754944e-38, %v178
    %v180 = vsel %vm177, %v179, %v175
    %v181 = vmul.f32 1.0, %v180
    %vm182 = vcmask 8192
    %183 = vst.msk [vmem:[#allocation3] sm:$0x1] %vm182, %v181
    // Predicated region
    $region22: #{tpu_custom_call.1} parent=1 // pred_check
      _
    $region23: #{tpu_custom_call.1} parent=1 // pred_check_branch
      %185 = sbr.rel (0) target = $region25
    $region24: #{tpu_custom_call.1} parent=1 // pred_region
      %187 = vsyncadd [#allocation4], 0
      %s189 = sshll.u32 [#allocation3], 4
      %s190 = int_to_ptr.vmem [resolvable:$true] %s189
      %s191 = sshll.u32 %s5, 4
      %s192 = int_to_ptr.hbm [resolvable:$true] %s191
      %194 = dma.vmem_to_hbm [thread:$0]  %s190, 16, %s192, [#allocation4]
    $region25: #{tpu_custom_call.1} parent=1 // pred_fallthru
      _
    // Predicated region
    $region26: #{tpu_custom_call.1} parent=1 // pred_check
      _
    $region27: #{tpu_custom_call.1} parent=1 // pred_check_branch
      %196 = sbr.rel (0) target = $region29
    $region28: #{tpu_custom_call.1} parent=1 // pred_region
      %198 = dma.done [#allocation4], 16
    $region29: #{tpu_custom_call.1} parent=1 // pred_fallthru
      _
    %199 = vsyncpa [#allocation4], 1

</llo_original>
